<compile_context>
chip_gen: v5e
topology: v5e:2x2
jax: 0.10.0
libtpu: 0.0.40
codegen_flags: <defaults>
</compile_context>

<pallas_src>
from functools import partial

import jax
import jax.numpy as jnp
from jax.experimental import pallas as pl
from jax.experimental.pallas import tpu as pltpu


def _relu_conv1x1_kernel(x_ref, w_ref, o_ref, *, compute_dtype):
    # x_ref: (Cin, HW)       activations for one batch element (VMEM)
    # w_ref: (Cout_blk, Cin) weight slice (VMEM)
    # o_ref: (Cout_blk, HW)  output slice (VMEM)
    x = jnp.maximum(x_ref[...], 0.0)                 # fused ReLU (VPU)
    w = w_ref[...]
    if compute_dtype != x.dtype:                     # optional bf16 MXU operands (v5e)
        x = x.astype(compute_dtype)
        w = w.astype(compute_dtype)
    o_ref[...] = jnp.dot(                            # MXU matmul, f32 accumulate
        w, x, preferred_element_type=jnp.float32
    ).astype(o_ref.dtype)


def _cout_splits_for_device(cout):
    """2-way Cout split only on chips with 2 TensorCores (v7x); else 1."""
    splits = 1
    try:
        info = pltpu.get_tpu_info()
        found = False
        for attr in ("num_cores", "num_tensorcores", "tensorcore_count", "core_count"):
            n = getattr(info, attr, None)
            if isinstance(n, int) and n > 1:
                splits, found = int(n), True
                break
        if not found:
            cv = str(getattr(info, "chip_version", "")).lower()
            if "7" in cv:
                splits = 2
    except Exception:
        try:
            kind = jax.devices()[0].device_kind.lower()
            if "v7" in kind or "7x" in kind:
                splits = 2
        except Exception:
            splits = 1
    splits = max(1, min(int(splits), 2))
    # Keep blocks legal: Cout_blk must be a positive multiple of 8.
    if cout % splits != 0 or (cout // splits) % 8 != 0:
        return 1
    return splits


def relu_conv1x1(x_nchw, weight_oihw, *, cout_splits=None, use_bf16_matmul=False):
    """ReLU followed by 1x1 conv (no bias), NCHW-native.

    x_nchw:      (N, Cin, H, W)    float32
    weight_oihw: (Cout, Cin, 1, 1) float32
    returns:     (N, Cout, H, W)   float32
    """
    N, Cin, H, W = x_nchw.shape
    Cout = weight_oihw.shape[0]
    HW = H * W

    if cout_splits is None:
        cout_splits = _cout_splits_for_device(Cout)
    cout_splits = max(1, int(cout_splits))
    if Cout % cout_splits != 0 or (Cout // cout_splits) % 8 != 0:
        cout_splits = 1
    cout_blk = Cout // cout_splits

    # Free reshapes only: no transposes are materialized in XLA.
    x3d = x_nchw.reshape(N, Cin, HW)            # (N, Cin, HW)
    w2d = weight_oihw.reshape(Cout, Cin)        # (Cout, Cin)

    kernel = partial(
        _relu_conv1x1_kernel,
        compute_dtype=jnp.bfloat16 if use_bf16_matmul else x_nchw.dtype,
    )

    cost = pl.CostEstimate(
        flops=2 * N * Cout * Cin * HW,
        transcendentals=0,
        bytes_accessed=4 * (N * Cin * HW + Cout * Cin + N * Cout * HW),
    )

    def build(split_sem):
        return pl.pallas_call(
            kernel,
            out_shape=jax.ShapeDtypeStruct((N, Cout, HW), x_nchw.dtype),
            # Split axis LEADING so the core partitioner shards it across TCs.
            grid=(cout_splits, N),
            in_specs=[
                # batch dim squeezed out; (Cin, HW) full-extent block per step.
                pl.BlockSpec((None, Cin, HW), lambda c, n: (n, 0, 0)),
                # weight slice over Cout; Cin stays full extent.
                pl.BlockSpec((cout_blk, Cin), lambda c, n: (c, 0)),
            ],
            out_specs=pl.BlockSpec((None, cout_blk, HW), lambda c, n: (n, c, 0)),
            compiler_params=pltpu.CompilerParams(
                dimension_semantics=(split_sem, pltpu.PARALLEL),
            ),
            cost_estimate=cost,
        )

    if cout_splits > 1:
        # CORE_PARALLEL engages both v7x TensorCores on the Cout-split axis;
        # fall back to plain PARALLEL if this toolchain rejects it.
        try:
            out3d = build(pltpu.CORE_PARALLEL)(x3d, w2d)
        except Exception:
            out3d = build(pltpu.PARALLEL)(x3d, w2d)
    else:
        out3d = build(pltpu.PARALLEL)(x3d, w2d)

    # Free reshape back to NCHW.
    return out3d.reshape(N, Cout, H, W)


if __name__ == "__main__":
    key = jax.random.PRNGKey(0)
    kx, kw = jax.random.split(key)

    # Shapes implied by the module's forward: x54 = randn(1, 288, 14, 14).
    N, C, H, W = 1, 288, 14, 14
    x = jax.random.normal(kx, (N, C, H, W), dtype=jnp.float32)

    # Deterministic synthetic weight init (Conv2d(288, 288, 1, 1), bias=False).
    fan_in = C * 1 * 1
    bound = 1.0 / jnp.sqrt(fan_in)
    weight = jax.random.uniform(
        kw, (C, C, 1, 1), dtype=jnp.float32, minval=-bound, maxval=bound
    )

    out = relu_conv1x1(x, weight)            # f32 MXU path (module numerics)
    out = jax.block_until_ready(out)

    # Reference check in plain JAX (same math path: relu then channel matmul).
    x_relu = jnp.maximum(x, 0.0)
    ref = jnp.einsum("nchw,oc->nohw", x_relu, weight.reshape(C, C))
    assert out.shape == (N, C, H, W)
    assert jnp.allclose(out, ref, atol=1e-4, rtol=1e-4)

    print("KERNEL_OK")
</pallas_src>

<mosaic_0001>
module attributes {stable_mosaic.version = 11 : i64} {
  func.func @_relu_conv1x1_kernel(%arg0: i32, %arg1: i32, %arg2: memref<1x288x196xf32, #tpu.memory_space<vmem>>, %arg3: memref<288x288xf32, #tpu.memory_space<vmem>>, %arg4: memref<1x288x196xf32, #tpu.memory_space<vmem>>) attributes {dimension_semantics = [#tpu.dimension_semantics<parallel>, #tpu.dimension_semantics<parallel>], iteration_bounds = array<i64: 1, 1>, scalar_prefetch = 0 : i64, scratch_operands = 0 : i64, tpu.core_type = #tpu.core_type<tc>, window_params = [{transform_indices = @transform_0, window_bounds = array<i64: 1, 288, 196>}, {transform_indices = @transform_1, window_bounds = array<i64: 288, 288>}, {transform_indices = @transform_2, window_bounds = array<i64: 1, 288, 196>}]} {
    %c0 = arith.constant 0 : index
    %c0_0 = arith.constant 0 : index
    %c0_1 = arith.constant 0 : index
    %0 = vector.load %arg2[%c0, %c0_0, %c0_1] : memref<1x288x196xf32, #tpu.memory_space<vmem>>, vector<1x288x196xf32>
    %1 = vector.shape_cast %0 : vector<1x288x196xf32> to vector<288x196xf32>
    %cst = arith.constant 0.000000e+00 : f32
    %2 = vector.broadcast %cst : f32 to vector<288x196xf32>
    %3 = arith.maximumf %1, %2 : vector<288x196xf32>
    %c0_2 = arith.constant 0 : index
    %c0_3 = arith.constant 0 : index
    %4 = vector.load %arg3[%c0_2, %c0_3] : memref<288x288xf32, #tpu.memory_space<vmem>>, vector<288x288xf32>
    %cst_4 = arith.constant dense<0.000000e+00> : vector<288x196xf32>
    %5 = tpu.matmul %4, %3, %cst_4 {dimension_numbers = #tpu.dot_dimension_numbers<[1], [0], [0], [1], [0, 0, 1, 1], [], []>} : vector<288x288xf32>, vector<288x196xf32>, vector<288x196xf32> -> vector<288x196xf32>
    %c0_5 = arith.constant 0 : index
    %c0_6 = arith.constant 0 : index
    %c0_7 = arith.constant 0 : index
    %6 = vector.load %arg4[%c0_5, %c0_6, %c0_7] : memref<1x288x196xf32, #tpu.memory_space<vmem>>, vector<1x288x196xf32>
    %7 = vector.shape_cast %6 : vector<1x288x196xf32> to vector<288x196xf32>
    %8 = vector.shape_cast %5 : vector<288x196xf32> to vector<1x288x196xf32>
    tpu.vector_store %arg4[%c0_5, %c0_6, %c0_7], %8 {strides = array<i32>} : memref<1x288x196xf32, #tpu.memory_space<vmem>>, vector<1x288x196xf32>,
    return
  }
  func.func @transform_0(%arg0: i32, %arg1: i32) -> (i32, i32, i32) {
    %c0_i32 = arith.constant 0 : i32
    %c0_i32_0 = arith.constant 0 : i32
    %c0_i32_1 = arith.constant 0 : i32
    return %arg1, %c0_i32, %c0_i32_0 : i32, i32, i32
  }
  func.func @transform_1(%arg0: i32, %arg1: i32) -> (i32, i32) {
    %c0_i32 = arith.constant 0 : i32
    %c0_i32_0 = arith.constant 0 : i32
    return %arg0, %c0_i32 : i32, i32
  }
  func.func @transform_2(%arg0: i32, %arg1: i32) -> (i32, i32, i32) {
    %c0_i32 = arith.constant 0 : i32
    %c0_i32_0 = arith.constant 0 : i32
    return %arg1, %arg0, %c0_i32 : i32, i32, i32
  }
}

</mosaic_0001>

<llo_original>
// kernel: tpu_custom_call.1
$region0: #{tpu_custom_call.1}
  #allocation0 [shape = 'u32[]', space=smem, size = 0x4, offset = 0x4, fixed_abs, tag = 'smem constant byte address 0x4 - core index']
  #allocation1 [shape = 'u32[72,128]{1,0:T(1,128)}', space=vmem, size = 0x9000, scoped, tag = 'internal scratch']
  %s0 = inlined_call_operand.hbm [shape: f32[1,288,196], index: 0, kind: input, shape index: {}]
  %s1 = inlined_call_operand.hbm [shape: f32[288,288], index: 1, kind: input, shape index: {}]
  %s2 = inlined_call_operand.hbm [shape: f32[1,288,196], index: 2, kind: output, shape index: {}]
  %s3 = sld [smem:[#allocation0]]
  $region26: #{tpu_custom_call.1} parent=0
    _
  %s5 = ssub.s32 1, %s3
  %s6 = scalar_select 0, %s5, %s3
  $region1: #{tpu_custom_call.1} parent=0
    #allocation2 [shape = 'u8[294912]{0}', space=vmem, size = 0x48000, scoped, tag = 'input window, operand 0, single buffered']
    #allocation3 [shape = 's32[1]{0}', space=sflag, size = 0x4, scoped, tag = 'scoped memory for tpu_custom_call.1']
    #allocation4 [shape = 's32[1]{0}', space=sflag, size = 0x4, scoped, tag = 'scoped memory for tpu_custom_call.1']
    #allocation5 [shape = 'u8[442368]{0}', space=vmem, size = 0x6c000, scoped, tag = 'input window, operand 1, single buffered']
    #allocation6 [shape = 's32[1]{0}', space=sflag, size = 0x4, scoped, tag = 'scoped memory for tpu_custom_call.1']
    #allocation7 [shape = 'u8[294912]{0}', space=vmem, size = 0x48000, scoped, tag = 'output window, operand 0, single buffered']
    %7 = vsyncpa [#allocation3], 0
    %8 = vsyncpa [#allocation6], 0
    %9 = vsyncpa [#allocation4], 0
    // Predicated region
    $region2: #{tpu_custom_call.1} parent=1 // pred_check
      _
    $region3: #{tpu_custom_call.1} parent=1 // pred_check_branch
      %11 = sbr.rel (0) target = $region5
    $region4: #{tpu_custom_call.1} parent=1 // pred_region
      %13 = vsyncadd [#allocation3], 0
      %s14 = sshll.u32 %s0, 4
      %s15 = int_to_ptr.hbm [resolvable:$true] %s14
      %s16 = sshll.u32 [#allocation2], 4
      %s17 = int_to_ptr.vmem [resolvable:$true] %s16
      %22 = dma.hbm_to_vmem [thread:$0]  %s15, 9216, %s17, [#allocation3], 256, 256, 16
    $region5: #{tpu_custom_call.1} parent=1 // pred_fallthru
      _
    // Predicated region
    $region6: #{tpu_custom_call.1} parent=1 // pred_check
      _
    $region7: #{tpu_custom_call.1} parent=1 // pred_check_branch
      %24 = sbr.rel (0) target = $region9
    $region8: #{tpu_custom_call.1} parent=1 // pred_region
      %26 = vsyncadd [#allocation6], 0
      %s27 = sshll.u32 %s1, 4
      %s28 = int_to_ptr.hbm [resolvable:$true] %s27
      %s29 = sshll.u32 [#allocation5], 4
      %s30 = int_to_ptr.vmem [resolvable:$true] %s29
      %35 = dma.hbm_to_vmem [thread:$0]  %s28, 13824, %s30, [#allocation6], 384, 384, 24
    $region9: #{tpu_custom_call.1} parent=1 // pred_fallthru
      _
    // Predicated region
    $region10: #{tpu_custom_call.1} parent=1 // pred_check
      _
    $region11: #{tpu_custom_call.1} parent=1 // pred_check_branch
      %37 = sbr.rel (0) target = $region13
    $region12: #{tpu_custom_call.1} parent=1 // pred_region
      %39 = dma.done [#allocation3], 9216
    $region13: #{tpu_custom_call.1} parent=1 // pred_fallthru
      _
    // Predicated region
    $region14: #{tpu_custom_call.1} parent=1 // pred_check
      _
    $region15: #{tpu_custom_call.1} parent=1 // pred_check_branch
      %41 = sbr.rel (0) target = $region17
    $region16: #{tpu_custom_call.1} parent=1 // pred_region
      %43 = dma.done [#allocation6], 13824
    $region17: #{tpu_custom_call.1} parent=1 // pred_fallthru
      _
    %v44 = vld [vmem:[#allocation2] sm:$0xff]
    %v45 = vld [vmem:[#allocation2 + $0x8] sm:$0xff]
    %v46 = vld [vmem:[#allocation2 + $0x10] sm:$0xff]
    %v47 = vld [vmem:[#allocation2 + $0x18] sm:$0xff]
    %v48 = vld [vmem:[#allocation2 + $0x20] sm:$0xff]
    %v49 = vld [vmem:[#allocation2 + $0x28] sm:$0xff]
    %v50 = vld [vmem:[#allocation2 + $0x30] sm:$0xff]
    %v51 = vld [vmem:[#allocation2 + $0x38] sm:$0xff]
    %v52 = vld [vmem:[#allocation2 + $0x40] sm:$0xff]
    %v53 = vld [vmem:[#allocation2 + $0x48] sm:$0xff]
    %v54 = vld [vmem:[#allocation2 + $0x50] sm:$0xff]
    %v55 = vld [vmem:[#allocation2 + $0x58] sm:$0xff]
    %v56 = vld [vmem:[#allocation2 + $0x60] sm:$0xff]
    %v57 = vld [vmem:[#allocation2 + $0x68] sm:$0xff]
    %v58 = vld [vmem:[#allocation2 + $0x70] sm:$0xff]
    %v59 = vld [vmem:[#allocation2 + $0x78] sm:$0xff]
    %v60 = vld [vmem:[#allocation2 + $0x80] sm:$0xff]
    %v61 = vld [vmem:[#allocation2 + $0x88] sm:$0xff]
    %v62 = vld [vmem:[#allocation2 + $0x90] sm:$0xff]
    %v63 = vld [vmem:[#allocation2 + $0x98] sm:$0xff]
    %v64 = vld [vmem:[#allocation2 + $0xa0] sm:$0xff]
    %v65 = vld [vmem:[#allocation2 + $0xa8] sm:$0xff]
    %v66 = vld [vmem:[#allocation2 + $0xb0] sm:$0xff]
    %v67 = vld [vmem:[#allocation2 + $0xb8] sm:$0xff]
    %v68 = vld [vmem:[#allocation2 + $0xc0] sm:$0xff]
    %v69 = vld [vmem:[#allocation2 + $0xc8] sm:$0xff]
    %v70 = vld [vmem:[#allocation2 + $0xd0] sm:$0xff]
    %v71 = vld [vmem:[#allocation2 + $0xd8] sm:$0xff]
    %v72 = vld [vmem:[#allocation2 + $0xe0] sm:$0xff]
    %v73 = vld [vmem:[#allocation2 + $0xe8] sm:$0xff]
    %v74 = vld [vmem:[#allocation2 + $0xf0] sm:$0xff]
    %v75 = vld [vmem:[#allocation2 + $0xf8] sm:$0xff]
    %v76 = vld [vmem:[#allocation2 + $0x100] sm:$0xff]
    %v77 = vld [vmem:[#allocation2 + $0x108] sm:$0xff]
    %v78 = vld [vmem:[#allocation2 + $0x110] sm:$0xff]
    %v79 = vld [vmem:[#allocation2 + $0x118] sm:$0xff]
    %v80 = vld [vmem:[#allocation2 + $0x120] sm:$0xff]
    %v81 = vld [vmem:[#allocation2 + $0x128] sm:$0xff]
    %v82 = vld [vmem:[#allocation2 + $0x130] sm:$0xff]
    %v83 = vld [vmem:[#allocation2 + $0x138] sm:$0xff]
    %v84 = vld [vmem:[#allocation2 + $0x140] sm:$0xff]
    %v85 = vld [vmem:[#allocation2 + $0x148] sm:$0xff]
    %v86 = vld [vmem:[#allocation2 + $0x150] sm:$0xff]
    %v87 = vld [vmem:[#allocation2 + $0x158] sm:$0xff]
    %v88 = vld [vmem:[#allocation2 + $0x160] sm:$0xff]
    %v89 = vld [vmem:[#allocation2 + $0x168] sm:$0xff]
    %v90 = vld [vmem:[#allocation2 + $0x170] sm:$0xff]
    %v91 = vld [vmem:[#allocation2 + $0x178] sm:$0xff]
    %v92 = vld [vmem:[#allocation2 + $0x180] sm:$0xff]
    %v93 = vld [vmem:[#allocation2 + $0x188] sm:$0xff]
    %v94 = vld [vmem:[#allocation2 + $0x190] sm:$0xff]
    %v95 = vld [vmem:[#allocation2 + $0x198] sm:$0xff]
    %v96 = vld [vmem:[#allocation2 + $0x1a0] sm:$0xff]
    %v97 = vld [vmem:[#allocation2 + $0x1a8] sm:$0xff]
    %v98 = vld [vmem:[#allocation2 + $0x1b0] sm:$0xff]
    %v99 = vld [vmem:[#allocation2 + $0x1b8] sm:$0xff]
    %v100 = vld [vmem:[#allocation2 + $0x1c0] sm:$0xff]
    %v101 = vld [vmem:[#allocation2 + $0x1c8] sm:$0xff]
    %v102 = vld [vmem:[#allocation2 + $0x1d0] sm:$0xff]
    %v103 = vld [vmem:[#allocation2 + $0x1d8] sm:$0xff]
    %v104 = vld [vmem:[#allocation2 + $0x1e0] sm:$0xff]
    %v105 = vld [vmem:[#allocation2 + $0x1e8] sm:$0xff]
    %v106 = vld [vmem:[#allocation2 + $0x1f0] sm:$0xff]
    %v107 = vld [vmem:[#allocation2 + $0x1f8] sm:$0xff]
    %v108 = vld [vmem:[#allocation2 + $0x200] sm:$0xff]
    %v109 = vld [vmem:[#allocation2 + $0x208] sm:$0xff]
    %v110 = vld [vmem:[#allocation2 + $0x210] sm:$0xff]
    %v111 = vld [vmem:[#allocation2 + $0x218] sm:$0xff]
    %v112 = vld [vmem:[#allocation2 + $0x220] sm:$0xff]
    %v113 = vld [vmem:[#allocation2 + $0x228] sm:$0xff]
    %v114 = vld [vmem:[#allocation2 + $0x230] sm:$0xff]
    %v115 = vld [vmem:[#allocation2 + $0x238] sm:$0xff]
    %v116 = vmax.f32 %v44, 0.0
    %v117 = vmax.f32 %v45, 0.0
    %v118 = vmax.f32 %v46, 0.0
    %v119 = vmax.f32 %v47, 0.0
    %v120 = vmax.f32 %v48, 0.0
    %v121 = vmax.f32 %v49, 0.0
    %v122 = vmax.f32 %v50, 0.0
    %v123 = vmax.f32 %v51, 0.0
    %v124 = vmax.f32 %v52, 0.0
    %v125 = vmax.f32 %v53, 0.0
    %v126 = vmax.f32 %v54, 0.0
    %v127 = vmax.f32 %v55, 0.0
    %v128 = vmax.f32 %v56, 0.0
    %v129 = vmax.f32 %v57, 0.0
    %v130 = vmax.f32 %v58, 0.0
    %v131 = vmax.f32 %v59, 0.0
    %v132 = vmax.f32 %v60, 0.0
    %v133 = vmax.f32 %v61, 0.0
    %v134 = vmax.f32 %v62, 0.0
    %v135 = vmax.f32 %v63, 0.0
    %v136 = vmax.f32 %v64, 0.0
    %v137 = vmax.f32 %v65, 0.0
    %v138 = vmax.f32 %v66, 0.0
    %v139 = vmax.f32 %v67, 0.0
    %v140 = vmax.f32 %v68, 0.0
    %v141 = vmax.f32 %v69, 0.0
    %v142 = vmax.f32 %v70, 0.0
    %v143 = vmax.f32 %v71, 0.0
    %v144 = vmax.f32 %v72, 0.0
    %v145 = vmax.f32 %v73, 0.0
    %v146 = vmax.f32 %v74, 0.0
    %v147 = vmax.f32 %v75, 0.0
    %v148 = vmax.f32 %v76, 0.0
    %v149 = vmax.f32 %v77, 0.0
    %v150 = vmax.f32 %v78, 0.0
    %v151 = vmax.f32 %v79, 0.0
    %v152 = vmax.f32 %v80, 0.0
    %v153 = vmax.f32 %v81, 0.0
    %v154 = vmax.f32 %v82, 0.0
    %v155 = vmax.f32 %v83, 0.0
    %v156 = vmax.f32 %v84, 0.0
    %v157 = vmax.f32 %v85, 0.0
    %v158 = vmax.f32 %v86, 0.0
    %v159 = vmax.f32 %v87, 0.0
    %v160 = vmax.f32 %v88, 0.0
    %v161 = vmax.f32 %v89, 0.0
    %v162 = vmax.f32 %v90, 0.0
    %v163 = vmax.f32 %v91, 0.0
    %v164 = vmax.f32 %v92, 0.0
    %v165 = vmax.f32 %v93, 0.0
    %v166 = vmax.f32 %v94, 0.0
    %v167 = vmax.f32 %v95, 0.0
    %v168 = vmax.f32 %v96, 0.0
    %v169 = vmax.f32 %v97, 0.0
    %v170 = vmax.f32 %v98, 0.0
    %v171 = vmax.f32 %v99, 0.0
    %v172 = vmax.f32 %v100, 0.0
    %v173 = vmax.f32 %v101, 0.0
    %v174 = vmax.f32 %v102, 0.0
    %v175 = vmax.f32 %v103, 0.0
    %v176 = vmax.f32 %v104, 0.0
    %v177 = vmax.f32 %v105, 0.0
    %v178 = vmax.f32 %v106, 0.0
    %v179 = vmax.f32 %v107, 0.0
    %v180 = vmax.f32 %v108, 0.0
    %v181 = vmax.f32 %v109, 0.0
    %v182 = vmax.f32 %v110, 0.0
    %v183 = vmax.f32 %v111, 0.0
    %v184 = vmax.f32 %v112, 0.0
    %v185 = vmax.f32 %v113, 0.0
    %v186 = vmax.f32 %v114, 0.0
    %v187 = vmax.f32 %v115, 0.0
    %v188 = vld [vmem:[#allocation5] sm:$0xff]
    %v189 = vld [vmem:[#allocation5 + $0x8] sm:$0xff]
    %v190 = vld [vmem:[#allocation5 + $0x10] sm:$0xff]
    %v191 = vld [vmem:[#allocation5 + $0x18] sm:$0xff]
    %v192 = vld [vmem:[#allocation5 + $0x20] sm:$0xff]
    %v193 = vld [vmem:[#allocation5 + $0x28] sm:$0xff]
    %v194 = vld [vmem:[#allocation5 + $0x30] sm:$0xff]
    %v195 = vld [vmem:[#allocation5 + $0x38] sm:$0xff]
    %v196 = vld [vmem:[#allocation5 + $0x40] sm:$0xff]
    %v197 = vld [vmem:[#allocation5 + $0x48] sm:$0xff]
    %v198 = vld [vmem:[#allocation5 + $0x50] sm:$0xff]
    %v199 = vld [vmem:[#allocation5 + $0x58] sm:$0xff]
    %v200 = vld [vmem:[#allocation5 + $0x60] sm:$0xff]
    %v201 = vld [vmem:[#allocation5 + $0x68] sm:$0xff]
    %v202 = vld [vmem:[#allocation5 + $0x70] sm:$0xff]
    %v203 = vld [vmem:[#allocation5 + $0x78] sm:$0xff]
    %v204 = vld [vmem:[#allocation5 + $0x80] sm:$0xff]
    %v205 = vld [vmem:[#allocation5 + $0x88] sm:$0xff]
    %v206 = vld [vmem:[#allocation5 + $0x90] sm:$0xff]
    %v207 = vld [vmem:[#allocation5 + $0x98] sm:$0xff]
    %v208 = vld [vmem:[#allocation5 + $0xa0] sm:$0xff]
    %v209 = vld [vmem:[#allocation5 + $0xa8] sm:$0xff]
    %v210 = vld [vmem:[#allocation5 + $0xb0] sm:$0xff]
    %v211 = vld [vmem:[#allocation5 + $0xb8] sm:$0xff]
    %v212 = vld [vmem:[#allocation5 + $0xc0] sm:$0xff]
    %v213 = vld [vmem:[#allocation5 + $0xc8] sm:$0xff]
    %v214 = vld [vmem:[#allocation5 + $0xd0] sm:$0xff]
    %v215 = vld [vmem:[#allocation5 + $0xd8] sm:$0xff]
    %v216 = vld [vmem:[#allocation5 + $0xe0] sm:$0xff]
    %v217 = vld [vmem:[#allocation5 + $0xe8] sm:$0xff]
    %v218 = vld [vmem:[#allocation5 + $0xf0] sm:$0xff]
    %v219 = vld [vmem:[#allocation5 + $0xf8] sm:$0xff]
    %v220 = vld [vmem:[#allocation5 + $0x100] sm:$0xff]
    %v221 = vld [vmem:[#allocation5 + $0x108] sm:$0xff]
    %v222 = vld [vmem:[#allocation5 + $0x110] sm:$0xff]
    %v223 = vld [vmem:[#allocation5 + $0x118] sm:$0xff]
    %v224 = vld [vmem:[#allocation5 + $0x120] sm:$0xff]
    %v225 = vld [vmem:[#allocation5 + $0x128] sm:$0xff]
    %v226 = vld [vmem:[#allocation5 + $0x130] sm:$0xff]
    %v227 = vld [vmem:[#allocation5 + $0x138] sm:$0xff]
    %v228 = vld [vmem:[#allocation5 + $0x140] sm:$0xff]
    %v229 = vld [vmem:[#allocation5 + $0x148] sm:$0xff]
    %v230 = vld [vmem:[#allocation5 + $0x150] sm:$0xff]
    %v231 = vld [vmem:[#allocation5 + $0x158] sm:$0xff]
    %v232 = vld [vmem:[#allocation5 + $0x160] sm:$0xff]
    %v233 = vld [vmem:[#allocation5 + $0x168] sm:$0xff]
    %v234 = vld [vmem:[#allocation5 + $0x170] sm:$0xff]
    %v235 = vld [vmem:[#allocation5 + $0x178] sm:$0xff]
    %v236 = vld [vmem:[#allocation5 + $0x180] sm:$0xff]
    %v237 = vld [vmem:[#allocation5 + $0x188] sm:$0xff]
    %v238 = vld [vmem:[#allocation5 + $0x190] sm:$0xff]
    %v239 = vld [vmem:[#allocation5 + $0x198] sm:$0xff]
    %v240 = vld [vmem:[#allocation5 + $0x1a0] sm:$0xff]
    %v241 = vld [vmem:[#allocation5 + $0x1a8] sm:$0xff]
    %v242 = vld [vmem:[#allocation5 + $0x1b0] sm:$0xff]
    %v243 = vld [vmem:[#allocation5 + $0x1b8] sm:$0xff]
    %v244 = vld [vmem:[#allocation5 + $0x1c0] sm:$0xff]
    %v245 = vld [vmem:[#allocation5 + $0x1c8] sm:$0xff]
    %v246 = vld [vmem:[#allocation5 + $0x1d0] sm:$0xff]
    %v247 = vld [vmem:[#allocation5 + $0x1d8] sm:$0xff]
    %v248 = vld [vmem:[#allocation5 + $0x1e0] sm:$0xff]
    %v249 = vld [vmem:[#allocation5 + $0x1e8] sm:$0xff]
    %v250 = vld [vmem:[#allocation5 + $0x1f0] sm:$0xff]
    %v251 = vld [vmem:[#allocation5 + $0x1f8] sm:$0xff]
    %v252 = vld [vmem:[#allocation5 + $0x200] sm:$0xff]
    %v253 = vld [vmem:[#allocation5 + $0x208] sm:$0xff]
    %v254 = vld [vmem:[#allocation5 + $0x210] sm:$0xff]
    %v255 = vld [vmem:[#allocation5 + $0x218] sm:$0xff]
    %v256 = vld [vmem:[#allocation5 + $0x220] sm:$0xff]
    %v257 = vld [vmem:[#allocation5 + $0x228] sm:$0xff]
    %v258 = vld [vmem:[#allocation5 + $0x230] sm:$0xff]
    %v259 = vld [vmem:[#allocation5 + $0x238] sm:$0xff]
    %v260 = vld [vmem:[#allocation5 + $0x240] sm:$0xff]
    %v261 = vld [vmem:[#allocation5 + $0x248] sm:$0xff]
    %v262 = vld [vmem:[#allocation5 + $0x250] sm:$0xff]
    %v263 = vld [vmem:[#allocation5 + $0x258] sm:$0xff]
    %v264 = vld [vmem:[#allocation5 + $0x260] sm:$0xff]
    %v265 = vld [vmem:[#allocation5 + $0x268] sm:$0xff]
    %v266 = vld [vmem:[#allocation5 + $0x270] sm:$0xff]
    %v267 = vld [vmem:[#allocation5 + $0x278] sm:$0xff]
    %v268 = vld [vmem:[#allocation5 + $0x280] sm:$0xff]
    %v269 = vld [vmem:[#allocation5 + $0x288] sm:$0xff]
    %v270 = vld [vmem:[#allocation5 + $0x290] sm:$0xff]
    %v271 = vld [vmem:[#allocation5 + $0x298] sm:$0xff]
    %v272 = vld [vmem:[#allocation5 + $0x2a0] sm:$0xff]
    %v273 = vld [vmem:[#allocation5 + $0x2a8] sm:$0xff]
    %v274 = vld [vmem:[#allocation5 + $0x2b0] sm:$0xff]
    %v275 = vld [vmem:[#allocation5 + $0x2b8] sm:$0xff]
    %v276 = vld [vmem:[#allocation5 + $0x2c0] sm:$0xff]
    %v277 = vld [vmem:[#allocation5 + $0x2c8] sm:$0xff]
    %v278 = vld [vmem:[#allocation5 + $0x2d0] sm:$0xff]
    %v279 = vld [vmem:[#allocation5 + $0x2d8] sm:$0xff]
    %v280 = vld [vmem:[#allocation5 + $0x2e0] sm:$0xff]
    %v281 = vld [vmem:[#allocation5 + $0x2e8] sm:$0xff]
    %v282 = vld [vmem:[#allocation5 + $0x2f0] sm:$0xff]
    %v283 = vld [vmem:[#allocation5 + $0x2f8] sm:$0xff]
    %v284 = vld [vmem:[#allocation5 + $0x300] sm:$0xff]
    %v285 = vld [vmem:[#allocation5 + $0x308] sm:$0xff]
    %v286 = vld [vmem:[#allocation5 + $0x310] sm:$0xff]
    %v287 = vld [vmem:[#allocation5 + $0x318] sm:$0xff]
    %v288 = vld [vmem:[#allocation5 + $0x320] sm:$0xff]
    %v289 = vld [vmem:[#allocation5 + $0x328] sm:$0xff]
    %v290 = vld [vmem:[#allocation5 + $0x330] sm:$0xff]
    %v291 = vld [vmem:[#allocation5 + $0x338] sm:$0xff]
    %v292 = vld [vmem:[#allocation5 + $0x340] sm:$0xff]
    %v293 = vld [vmem:[#allocation5 + $0x348] sm:$0xff]
    %v294 = vld [vmem:[#allocation5 + $0x350] sm:$0xff]
    %v295 = vld [vmem:[#allocation5 + $0x358] sm:$0xff]
    %vm296 = vcmask 261120
    %v298 = vsel %vm296, %v190, 0
    %v301 = vsel %vm296, %v193, 0
    %v304 = vsel %vm296, %v196, 0
    %v307 = vsel %vm296, %v199, 0
    %v310 = vsel %vm296, %v202, 0
    %v313 = vsel %vm296, %v205, 0
    %v316 = vsel %vm296, %v208, 0
    %v319 = vsel %vm296, %v211, 0
    %v322 = vsel %vm296, %v214, 0
    %v325 = vsel %vm296, %v217, 0
    %v328 = vsel %vm296, %v220, 0
    %v331 = vsel %vm296, %v223, 0
    %v334 = vsel %vm296, %v226, 0
    %v337 = vsel %vm296, %v229, 0
    %v340 = vsel %vm296, %v232, 0
    %v343 = vsel %vm296, %v235, 0
    %v346 = vsel %vm296, %v238, 0
    %v349 = vsel %vm296, %v241, 0
    %v352 = vsel %vm296, %v244, 0
    %v355 = vsel %vm296, %v247, 0
    %v358 = vsel %vm296, %v250, 0
    %v361 = vsel %vm296, %v253, 0
    %v364 = vsel %vm296, %v256, 0
    %v367 = vsel %vm296, %v259, 0
    %v370 = vsel %vm296, %v262, 0
    %v373 = vsel %vm296, %v265, 0
    %v376 = vsel %vm296, %v268, 0
    %v379 = vsel %vm296, %v271, 0
    %v382 = vsel %vm296, %v274, 0
    %v385 = vsel %vm296, %v277, 0
    %v388 = vsel %vm296, %v280, 0
    %v391 = vsel %vm296, %v283, 0
    %v394 = vsel %vm296, %v286, 0
    %v397 = vsel %vm296, %v289, 0
    %v400 = vsel %vm296, %v292, 0
    %v403 = vsel %vm296, %v295, 0
    %405 = vmatpush.msra.mxu0 %v146
    %406 = vmatpush.msra.mxu0 %v144
    %407 = vmatpush.msra.mxu0 %v142
    %408 = vmatpush.msra.mxu0 %v140
    %409 = vmatpush.msra.mxu0 %v138
    %410 = vmatpush.msra.mxu0 %v136
    %411 = vmatpush.msra.mxu0 %v134
    %412 = vmatpush.msra.mxu0 %v132
    %413 = vmatpush.msra.mxu0 %v130
    %414 = vmatpush.msra.mxu0 %v128
    %415 = vmatpush.msra.mxu0 %v126
    %416 = vmatpush.msra.mxu0 %v124
    %417 = vmatpush.msra.mxu0 %v122
    %418 = vmatpush.msra.mxu0 %v120
    %419 = vmatpush.msra.mxu0 %v118
    %420 = vmatpush.msra.mxu0 %v116
    %421 = vmatmul.f32.gmra.mxu0 %v188
    %v422 = vpop.f32.mrf.mxu0
    %v423 = vadd.f32 0.0, %v422
    %424 = vmatmul.f32.gmra.mxu0 %v191
    %v425 = vpop.f32.mrf.mxu0
    %v426 = vadd.f32 0.0, %v425
    %427 = vmatmul.f32.gmra.mxu0 %v194
    %v428 = vpop.f32.mrf.mxu0
    %v429 = vadd.f32 0.0, %v428
    %430 = vmatmul.f32.gmra.mxu0 %v197
    %v431 = vpop.f32.mrf.mxu0
    %v432 = vadd.f32 0.0, %v431
    %433 = vmatmul.f32.gmra.mxu0 %v200
    %v434 = vpop.f32.mrf.mxu0
    %v435 = vadd.f32 0.0, %v434
    %436 = vmatmul.f32.gmra.mxu0 %v203
    %v437 = vpop.f32.mrf.mxu0
    %v438 = vadd.f32 0.0, %v437
    %439 = vmatmul.f32.gmra.mxu0 %v206
    %v440 = vpop.f32.mrf.mxu0
    %v441 = vadd.f32 0.0, %v440
    %442 = vmatmul.f32.gmra.mxu0 %v209
    %v443 = vpop.f32.mrf.mxu0
    %v444 = vadd.f32 0.0, %v443
    %445 = vmatmul.f32.gmra.mxu0 %v212
    %v446 = vpop.f32.mrf.mxu0
    %v447 = vadd.f32 0.0, %v446
    %448 = vmatmul.f32.gmra.mxu0 %v215
    %v449 = vpop.f32.mrf.mxu0
    %v450 = vadd.f32 0.0, %v449
    %451 = vmatmul.f32.gmra.mxu0 %v218
    %v452 = vpop.f32.mrf.mxu0
    %v453 = vadd.f32 0.0, %v452
    %454 = vmatmul.f32.gmra.mxu0 %v221
    %v455 = vpop.f32.mrf.mxu0
    %v456 = vadd.f32 0.0, %v455
    %457 = vmatmul.f32.gmra.mxu0 %v224
    %v458 = vpop.f32.mrf.mxu0
    %v459 = vadd.f32 0.0, %v458
    %460 = vmatmul.f32.gmra.mxu0 %v227
    %v461 = vpop.f32.mrf.mxu0
    %v462 = vadd.f32 0.0, %v461
    %463 = vmatmul.f32.gmra.mxu0 %v230
    %v464 = vpop.f32.mrf.mxu0
    %v465 = vadd.f32 0.0, %v464
    %466 = vmatmul.f32.gmra.mxu0 %v233
    %v467 = vpop.f32.mrf.mxu0
    %v468 = vadd.f32 0.0, %v467
    %469 = vmatmul.f32.gmra.mxu0 %v236
    %v470 = vpop.f32.mrf.mxu0
    %v471 = vadd.f32 0.0, %v470
    %472 = vmatmul.f32.gmra.mxu0 %v239
    %v473 = vpop.f32.mrf.mxu0
    %v474 = vadd.f32 0.0, %v473
    %475 = vmatmul.f32.gmra.mxu0 %v242
    %v476 = vpop.f32.mrf.mxu0
    %v477 = vadd.f32 0.0, %v476
    %478 = vmatmul.f32.gmra.mxu0 %v245
    %v479 = vpop.f32.mrf.mxu0
    %v480 = vadd.f32 0.0, %v479
    %481 = vmatmul.f32.gmra.mxu0 %v248
    %v482 = vpop.f32.mrf.mxu0
    %v483 = vadd.f32 0.0, %v482
    %484 = vmatmul.f32.gmra.mxu0 %v251
    %v485 = vpop.f32.mrf.mxu0
    %v486 = vadd.f32 0.0, %v485
    %487 = vmatmul.f32.gmra.mxu0 %v254
    %v488 = vpop.f32.mrf.mxu0
    %v489 = vadd.f32 0.0, %v488
    %490 = vmatmul.f32.gmra.mxu0 %v257
    %v491 = vpop.f32.mrf.mxu0
    %v492 = vadd.f32 0.0, %v491
    %493 = vmatmul.f32.gmra.mxu0 %v260
    %v494 = vpop.f32.mrf.mxu0
    %v495 = vadd.f32 0.0, %v494
    %496 = vmatmul.f32.gmra.mxu0 %v263
    %v497 = vpop.f32.mrf.mxu0
    %v498 = vadd.f32 0.0, %v497
    %499 = vmatmul.f32.gmra.mxu0 %v266
    %v500 = vpop.f32.mrf.mxu0
    %v501 = vadd.f32 0.0, %v500
    %502 = vmatmul.f32.gmra.mxu0 %v269
    %v503 = vpop.f32.mrf.mxu0
    %v504 = vadd.f32 0.0, %v503
    %505 = vmatmul.f32.gmra.mxu0 %v272
    %v506 = vpop.f32.mrf.mxu0
    %v507 = vadd.f32 0.0, %v506
    %508 = vmatmul.f32.gmra.mxu0 %v275
    %v509 = vpop.f32.mrf.mxu0
    %v510 = vadd.f32 0.0, %v509
    %511 = vmatmul.f32.gmra.mxu0 %v278
    %v512 = vpop.f32.mrf.mxu0
    %v513 = vadd.f32 0.0, %v512
    %514 = vmatmul.f32.gmra.mxu0 %v281
    %v515 = vpop.f32.mrf.mxu0
    %v516 = vadd.f32 0.0, %v515
    %517 = vmatmul.f32.gmra.mxu0 %v284
    %v518 = vpop.f32.mrf.mxu0
    %v519 = vadd.f32 0.0, %v518
    %520 = vmatmul.f32.gmra.mxu0 %v287
    %v521 = vpop.f32.mrf.mxu0
    %v522 = vadd.f32 0.0, %v521
    %523 = vmatmul.f32.gmra.mxu0 %v290
    %v524 = vpop.f32.mrf.mxu0
    %v525 = vadd.f32 0.0, %v524
    %526 = vmatmul.f32.gmra.mxu0 %v293
    %v527 = vpop.f32.mrf.mxu0
    %v528 = vadd.f32 0.0, %v527
    %529 = vdwg.mxu0
    %530 = vmatpush.msra.mxu0 %v178
    %531 = vmatpush.msra.mxu0 %v176
    %532 = vmatpush.msra.mxu0 %v174
    %533 = vmatpush.msra.mxu0 %v172
    %534 = vmatpush.msra.mxu0 %v170
    %535 = vmatpush.msra.mxu0 %v168
    %536 = vmatpush.msra.mxu0 %v166
    %537 = vmatpush.msra.mxu0 %v164
    %538 = vmatpush.msra.mxu0 %v162
    %539 = vmatpush.msra.mxu0 %v160
    %540 = vmatpush.msra.mxu0 %v158
    %541 = vmatpush.msra.mxu0 %v156
    %542 = vmatpush.msra.mxu0 %v154
    %543 = vmatpush.msra.mxu0 %v152
    %544 = vmatpush.msra.mxu0 %v150
    %545 = vmatpush.msra.mxu0 %v148
    %546 = vmatmul.f32.gmra.mxu0 %v189
    %v547 = vpop.f32.mrf.mxu0
    %v548 = vadd.f32 %v423, %v547
    %549 = vmatmul.f32.gmra.mxu0 %v192
    %v550 = vpop.f32.mrf.mxu0
    %v551 = vadd.f32 %v426, %v550
    %552 = vmatmul.f32.gmra.mxu0 %v195
    %v553 = vpop.f32.mrf.mxu0
    %v554 = vadd.f32 %v429, %v553
    %555 = vmatmul.f32.gmra.mxu0 %v198
    %v556 = vpop.f32.mrf.mxu0
    %v557 = vadd.f32 %v432, %v556
    %558 = vmatmul.f32.gmra.mxu0 %v201
    %v559 = vpop.f32.mrf.mxu0
    %v560 = vadd.f32 %v435, %v559
    %561 = vmatmul.f32.gmra.mxu0 %v204
    %v562 = vpop.f32.mrf.mxu0
    %v563 = vadd.f32 %v438, %v562
    %564 = vmatmul.f32.gmra.mxu0 %v207
    %v565 = vpop.f32.mrf.mxu0
    %v566 = vadd.f32 %v441, %v565
    %567 = vmatmul.f32.gmra.mxu0 %v210
    %v568 = vpop.f32.mrf.mxu0
    %v569 = vadd.f32 %v444, %v568
    %570 = vmatmul.f32.gmra.mxu0 %v213
    %v571 = vpop.f32.mrf.mxu0
    %v572 = vadd.f32 %v447, %v571
    %573 = vmatmul.f32.gmra.mxu0 %v216
    %v574 = vpop.f32.mrf.mxu0
    %v575 = vadd.f32 %v450, %v574
    %576 = vmatmul.f32.gmra.mxu0 %v219
    %v577 = vpop.f32.mrf.mxu0
    %v578 = vadd.f32 %v453, %v577
    %579 = vmatmul.f32.gmra.mxu0 %v222
    %v580 = vpop.f32.mrf.mxu0
    %v581 = vadd.f32 %v456, %v580
    %582 = vmatmul.f32.gmra.mxu0 %v225
    %v583 = vpop.f32.mrf.mxu0
    %v584 = vadd.f32 %v459, %v583
    %585 = vmatmul.f32.gmra.mxu0 %v228
    %v586 = vpop.f32.mrf.mxu0
    %v587 = vadd.f32 %v462, %v586
    %588 = vmatmul.f32.gmra.mxu0 %v231
    %v589 = vpop.f32.mrf.mxu0
    %v590 = vadd.f32 %v465, %v589
    %591 = vmatmul.f32.gmra.mxu0 %v234
    %v592 = vpop.f32.mrf.mxu0
    %v593 = vadd.f32 %v468, %v592
    %594 = vmatmul.f32.gmra.mxu0 %v237
    %v595 = vpop.f32.mrf.mxu0
    %v596 = vadd.f32 %v471, %v595
    %597 = vmatmul.f32.gmra.mxu0 %v240
    %v598 = vpop.f32.mrf.mxu0
    %v599 = vadd.f32 %v474, %v598
    %600 = vmatmul.f32.gmra.mxu0 %v243
    %v601 = vpop.f32.mrf.mxu0
    %v602 = vadd.f32 %v477, %v601
    %603 = vmatmul.f32.gmra.mxu0 %v246
    %v604 = vpop.f32.mrf.mxu0
    %v605 = vadd.f32 %v480, %v604
    %606 = vmatmul.f32.gmra.mxu0 %v249
    %v607 = vpop.f32.mrf.mxu0
    %v608 = vadd.f32 %v483, %v607
    %609 = vmatmul.f32.gmra.mxu0 %v252
    %v610 = vpop.f32.mrf.mxu0
    %v611 = vadd.f32 %v486, %v610
    %612 = vmatmul.f32.gmra.mxu0 %v255
    %v613 = vpop.f32.mrf.mxu0
    %v614 = vadd.f32 %v489, %v613
    %615 = vmatmul.f32.gmra.mxu0 %v258
    %v616 = vpop.f32.mrf.mxu0
    %v617 = vadd.f32 %v492, %v616
    %618 = vmatmul.f32.gmra.mxu0 %v261
    %v619 = vpop.f32.mrf.mxu0
    %v620 = vadd.f32 %v495, %v619
    %621 = vmatmul.f32.gmra.mxu0 %v264
    %v622 = vpop.f32.mrf.mxu0
    %v623 = vadd.f32 %v498, %v622
    %624 = vmatmul.f32.gmra.mxu0 %v267
    %v625 = vpop.f32.mrf.mxu0
    %v626 = vadd.f32 %v501, %v625
    %627 = vmatmul.f32.gmra.mxu0 %v270
    %v628 = vpop.f32.mrf.mxu0
    %v629 = vadd.f32 %v504, %v628
    %630 = vmatmul.f32.gmra.mxu0 %v273
    %v631 = vpop.f32.mrf.mxu0
    %v632 = vadd.f32 %v507, %v631
    %633 = vmatmul.f32.gmra.mxu0 %v276
    %v634 = vpop.f32.mrf.mxu0
    %v635 = vadd.f32 %v510, %v634
    %636 = vmatmul.f32.gmra.mxu0 %v279
    %v637 = vpop.f32.mrf.mxu0
    %v638 = vadd.f32 %v513, %v637
    %639 = vmatmul.f32.gmra.mxu0 %v282
    %v640 = vpop.f32.mrf.mxu0
    %v641 = vadd.f32 %v516, %v640
    %642 = vmatmul.f32.gmra.mxu0 %v285
    %v643 = vpop.f32.mrf.mxu0
    %v644 = vadd.f32 %v519, %v643
    %645 = vmatmul.f32.gmra.mxu0 %v288
    %v646 = vpop.f32.mrf.mxu0
    %v647 = vadd.f32 %v522, %v646
    %648 = vmatmul.f32.gmra.mxu0 %v291
    %v649 = vpop.f32.mrf.mxu0
    %v650 = vadd.f32 %v525, %v649
    %651 = vmatmul.f32.gmra.mxu0 %v294
    %v652 = vpop.f32.mrf.mxu0
    %v653 = vadd.f32 %v528, %v652
    %654 = vdwg.mxu0
    %655 = vmatpush.msra.mxu0 0.0
    %656 = vmatpush.msra.mxu0 0.0
    %657 = vmatpush.msra.mxu0 0.0
    %658 = vmatpush.msra.mxu0 0.0
    %659 = vmatpush.msra.mxu0 0.0
    %660 = vmatpush.msra.mxu0 0.0
    %661 = vmatpush.msra.mxu0 0.0
    %662 = vmatpush.msra.mxu0 0.0
    %663 = vmatpush.msra.mxu0 0.0
    %664 = vmatpush.msra.mxu0 0.0
    %665 = vmatpush.msra.mxu0 0.0
    %666 = vmatpush.msra.mxu0 0.0
    %667 = vmatpush.msra.mxu0 %v186
    %668 = vmatpush.msra.mxu0 %v184
    %669 = vmatpush.msra.mxu0 %v182
    %670 = vmatpush.msra.mxu0 %v180
    %671 = vmatmul.f32.gmra.mxu0 %v298
    %v672 = vpop.f32.mrf.mxu0
    %v673 = vadd.f32 %v548, %v672
    %674 = vmatmul.f32.gmra.mxu0 %v301
    %v675 = vpop.f32.mrf.mxu0
    %v676 = vadd.f32 %v551, %v675
    %677 = vmatmul.f32.gmra.mxu0 %v304
    %v678 = vpop.f32.mrf.mxu0
    %v679 = vadd.f32 %v554, %v678
    %680 = vmatmul.f32.gmra.mxu0 %v307
    %v681 = vpop.f32.mrf.mxu0
    %v682 = vadd.f32 %v557, %v681
    %683 = vmatmul.f32.gmra.mxu0 %v310
    %v684 = vpop.f32.mrf.mxu0
    %v685 = vadd.f32 %v560, %v684
    %686 = vmatmul.f32.gmra.mxu0 %v313
    %v687 = vpop.f32.mrf.mxu0
    %v688 = vadd.f32 %v563, %v687
    %689 = vmatmul.f32.gmra.mxu0 %v316
    %v690 = vpop.f32.mrf.mxu0
    %v691 = vadd.f32 %v566, %v690
    %692 = vmatmul.f32.gmra.mxu0 %v319
    %v693 = vpop.f32.mrf.mxu0
    %v694 = vadd.f32 %v569, %v693
    %695 = vmatmul.f32.gmra.mxu0 %v322
    %v696 = vpop.f32.mrf.mxu0
    %v697 = vadd.f32 %v572, %v696
    %698 = vmatmul.f32.gmra.mxu0 %v325
    %v699 = vpop.f32.mrf.mxu0
    %v700 = vadd.f32 %v575, %v699
    %701 = vmatmul.f32.gmra.mxu0 %v328
    %v702 = vpop.f32.mrf.mxu0
    %v703 = vadd.f32 %v578, %v702
    %704 = vmatmul.f32.gmra.mxu0 %v331
    %v705 = vpop.f32.mrf.mxu0
    %v706 = vadd.f32 %v581, %v705
    %707 = vmatmul.f32.gmra.mxu0 %v334
    %v708 = vpop.f32.mrf.mxu0
    %v709 = vadd.f32 %v584, %v708
    %710 = vmatmul.f32.gmra.mxu0 %v337
    %v711 = vpop.f32.mrf.mxu0
    %v712 = vadd.f32 %v587, %v711
    %713 = vmatmul.f32.gmra.mxu0 %v340
    %v714 = vpop.f32.mrf.mxu0
    %v715 = vadd.f32 %v590, %v714
    %716 = vmatmul.f32.gmra.mxu0 %v343
    %v717 = vpop.f32.mrf.mxu0
    %v718 = vadd.f32 %v593, %v717
    %719 = vmatmul.f32.gmra.mxu0 %v346
    %v720 = vpop.f32.mrf.mxu0
    %v721 = vadd.f32 %v596, %v720
    %722 = vmatmul.f32.gmra.mxu0 %v349
    %v723 = vpop.f32.mrf.mxu0
    %v724 = vadd.f32 %v599, %v723
    %725 = vmatmul.f32.gmra.mxu0 %v352
    %v726 = vpop.f32.mrf.mxu0
    %v727 = vadd.f32 %v602, %v726
    %728 = vmatmul.f32.gmra.mxu0 %v355
    %v729 = vpop.f32.mrf.mxu0
    %v730 = vadd.f32 %v605, %v729
    %731 = vmatmul.f32.gmra.mxu0 %v358
    %v732 = vpop.f32.mrf.mxu0
    %v733 = vadd.f32 %v608, %v732
    %734 = vmatmul.f32.gmra.mxu0 %v361
    %v735 = vpop.f32.mrf.mxu0
    %v736 = vadd.f32 %v611, %v735
    %737 = vmatmul.f32.gmra.mxu0 %v364
    %v738 = vpop.f32.mrf.mxu0
    %v739 = vadd.f32 %v614, %v738
    %740 = vmatmul.f32.gmra.mxu0 %v367
    %v741 = vpop.f32.mrf.mxu0
    %v742 = vadd.f32 %v617, %v741
    %743 = vmatmul.f32.gmra.mxu0 %v370
    %v744 = vpop.f32.mrf.mxu0
    %v745 = vadd.f32 %v620, %v744
    %746 = vmatmul.f32.gmra.mxu0 %v373
    %v747 = vpop.f32.mrf.mxu0
    %v748 = vadd.f32 %v623, %v747
    %749 = vmatmul.f32.gmra.mxu0 %v376
    %v750 = vpop.f32.mrf.mxu0
    %v751 = vadd.f32 %v626, %v750
    %752 = vmatmul.f32.gmra.mxu0 %v379
    %v753 = vpop.f32.mrf.mxu0
    %v754 = vadd.f32 %v629, %v753
    %755 = vmatmul.f32.gmra.mxu0 %v382
    %v756 = vpop.f32.mrf.mxu0
    %v757 = vadd.f32 %v632, %v756
    %758 = vmatmul.f32.gmra.mxu0 %v385
    %v759 = vpop.f32.mrf.mxu0
    %v760 = vadd.f32 %v635, %v759
    %761 = vmatmul.f32.gmra.mxu0 %v388
    %v762 = vpop.f32.mrf.mxu0
    %v763 = vadd.f32 %v638, %v762
    %764 = vmatmul.f32.gmra.mxu0 %v391
    %v765 = vpop.f32.mrf.mxu0
    %v766 = vadd.f32 %v641, %v765
    %767 = vmatmul.f32.gmra.mxu0 %v394
    %v768 = vpop.f32.mrf.mxu0
    %v769 = vadd.f32 %v644, %v768
    %770 = vmatmul.f32.gmra.mxu0 %v397
    %v771 = vpop.f32.mrf.mxu0
    %v772 = vadd.f32 %v647, %v771
    %773 = vmatmul.f32.gmra.mxu0 %v400
    %v774 = vpop.f32.mrf.mxu0
    %v775 = vadd.f32 %v650, %v774
    %776 = vmatmul.f32.gmra.mxu0 %v403
    %v777 = vpop.f32.mrf.mxu0
    %v778 = vadd.f32 %v653, %v777
    %779 = vdwg.mxu0
    %780 = vmatpush.msra.mxu0 %v147
    %781 = vmatpush.msra.mxu0 %v145
    %782 = vmatpush.msra.mxu0 %v143
    %783 = vmatpush.msra.mxu0 %v141
    %784 = vmatpush.msra.mxu0 %v139
    %785 = vmatpush.msra.mxu0 %v137
    %786 = vmatpush.msra.mxu0 %v135
    %787 = vmatpush.msra.mxu0 %v133
    %788 = vmatpush.msra.mxu0 %v131
    %789 = vmatpush.msra.mxu0 %v129
    %790 = vmatpush.msra.mxu0 %v127
    %791 = vmatpush.msra.mxu0 %v125
    %792 = vmatpush.msra.mxu0 %v123
    %793 = vmatpush.msra.mxu0 %v121
    %794 = vmatpush.msra.mxu0 %v119
    %795 = vmatpush.msra.mxu0 %v117
    %796 = vmatmul.f32.gmra.mxu0 %v188
    %v797 = vpop.f32.mrf.mxu0
    %v798 = vadd.f32 0.0, %v797
    %799 = vmatmul.f32.gmra.mxu0 %v191
    %v800 = vpop.f32.mrf.mxu0
    %v801 = vadd.f32 0.0, %v800
    %802 = vmatmul.f32.gmra.mxu0 %v194
    %v803 = vpop.f32.mrf.mxu0
    %v804 = vadd.f32 0.0, %v803
    %805 = vmatmul.f32.gmra.mxu0 %v197
    %v806 = vpop.f32.mrf.mxu0
    %v807 = vadd.f32 0.0, %v806
    %808 = vmatmul.f32.gmra.mxu0 %v200
    %v809 = vpop.f32.mrf.mxu0
    %v810 = vadd.f32 0.0, %v809
    %811 = vmatmul.f32.gmra.mxu0 %v203
    %v812 = vpop.f32.mrf.mxu0
    %v813 = vadd.f32 0.0, %v812
    %814 = vmatmul.f32.gmra.mxu0 %v206
    %v815 = vpop.f32.mrf.mxu0
    %v816 = vadd.f32 0.0, %v815
    %817 = vmatmul.f32.gmra.mxu0 %v209
    %v818 = vpop.f32.mrf.mxu0
    %v819 = vadd.f32 0.0, %v818
    %820 = vmatmul.f32.gmra.mxu0 %v212
    %v821 = vpop.f32.mrf.mxu0
    %v822 = vadd.f32 0.0, %v821
    %823 = vmatmul.f32.gmra.mxu0 %v215
    %v824 = vpop.f32.mrf.mxu0
    %v825 = vadd.f32 0.0, %v824
    %826 = vmatmul.f32.gmra.mxu0 %v218
    %v827 = vpop.f32.mrf.mxu0
    %v828 = vadd.f32 0.0, %v827
    %829 = vmatmul.f32.gmra.mxu0 %v221
    %v830 = vpop.f32.mrf.mxu0
    %v831 = vadd.f32 0.0, %v830
    %832 = vmatmul.f32.gmra.mxu0 %v224
    %v833 = vpop.f32.mrf.mxu0
    %v834 = vadd.f32 0.0, %v833
    %835 = vmatmul.f32.gmra.mxu0 %v227
    %v836 = vpop.f32.mrf.mxu0
    %v837 = vadd.f32 0.0, %v836
    %838 = vmatmul.f32.gmra.mxu0 %v230
    %v839 = vpop.f32.mrf.mxu0
    %v840 = vadd.f32 0.0, %v839
    %841 = vmatmul.f32.gmra.mxu0 %v233
    %v842 = vpop.f32.mrf.mxu0
    %v843 = vadd.f32 0.0, %v842
    %844 = vmatmul.f32.gmra.mxu0 %v236
    %v845 = vpop.f32.mrf.mxu0
    %v846 = vadd.f32 0.0, %v845
    %847 = vmatmul.f32.gmra.mxu0 %v239
    %v848 = vpop.f32.mrf.mxu0
    %v849 = vadd.f32 0.0, %v848
    %850 = vmatmul.f32.gmra.mxu0 %v242
    %v851 = vpop.f32.mrf.mxu0
    %v852 = vadd.f32 0.0, %v851
    %853 = vmatmul.f32.gmra.mxu0 %v245
    %v854 = vpop.f32.mrf.mxu0
    %v855 = vadd.f32 0.0, %v854
    %856 = vmatmul.f32.gmra.mxu0 %v248
    %v857 = vpop.f32.mrf.mxu0
    %v858 = vadd.f32 0.0, %v857
    %859 = vmatmul.f32.gmra.mxu0 %v251
    %v860 = vpop.f32.mrf.mxu0
    %v861 = vadd.f32 0.0, %v860
    %862 = vmatmul.f32.gmra.mxu0 %v254
    %v863 = vpop.f32.mrf.mxu0
    %v864 = vadd.f32 0.0, %v863
    %865 = vmatmul.f32.gmra.mxu0 %v257
    %v866 = vpop.f32.mrf.mxu0
    %v867 = vadd.f32 0.0, %v866
    %868 = vmatmul.f32.gmra.mxu0 %v260
    %v869 = vpop.f32.mrf.mxu0
    %v870 = vadd.f32 0.0, %v869
    %871 = vmatmul.f32.gmra.mxu0 %v263
    %v872 = vpop.f32.mrf.mxu0
    %v873 = vadd.f32 0.0, %v872
    %874 = vmatmul.f32.gmra.mxu0 %v266
    %v875 = vpop.f32.mrf.mxu0
    %v876 = vadd.f32 0.0, %v875
    %877 = vmatmul.f32.gmra.mxu0 %v269
    %v878 = vpop.f32.mrf.mxu0
    %v879 = vadd.f32 0.0, %v878
    %880 = vmatmul.f32.gmra.mxu0 %v272
    %v881 = vpop.f32.mrf.mxu0
    %v882 = vadd.f32 0.0, %v881
    %883 = vmatmul.f32.gmra.mxu0 %v275
    %v884 = vpop.f32.mrf.mxu0
    %v885 = vadd.f32 0.0, %v884
    %886 = vmatmul.f32.gmra.mxu0 %v278
    %v887 = vpop.f32.mrf.mxu0
    %v888 = vadd.f32 0.0, %v887
    %889 = vmatmul.f32.gmra.mxu0 %v281
    %v890 = vpop.f32.mrf.mxu0
    %v891 = vadd.f32 0.0, %v890
    %892 = vmatmul.f32.gmra.mxu0 %v284
    %v893 = vpop.f32.mrf.mxu0
    %v894 = vadd.f32 0.0, %v893
    %895 = vmatmul.f32.gmra.mxu0 %v287
    %v896 = vpop.f32.mrf.mxu0
    %v897 = vadd.f32 0.0, %v896
    %898 = vmatmul.f32.gmra.mxu0 %v290
    %v899 = vpop.f32.mrf.mxu0
    %v900 = vadd.f32 0.0, %v899
    %901 = vmatmul.f32.gmra.mxu0 %v293
    %v902 = vpop.f32.mrf.mxu0
    %v903 = vadd.f32 0.0, %v902
    %904 = vdwg.mxu0
    %905 = vmatpush.msra.mxu0 %v179
    %906 = vmatpush.msra.mxu0 %v177
    %907 = vmatpush.msra.mxu0 %v175
    %908 = vmatpush.msra.mxu0 %v173
    %909 = vmatpush.msra.mxu0 %v171
    %910 = vmatpush.msra.mxu0 %v169
    %911 = vmatpush.msra.mxu0 %v167
    %912 = vmatpush.msra.mxu0 %v165
    %913 = vmatpush.msra.mxu0 %v163
    %914 = vmatpush.msra.mxu0 %v161
    %915 = vmatpush.msra.mxu0 %v159
    %916 = vmatpush.msra.mxu0 %v157
    %917 = vmatpush.msra.mxu0 %v155
    %918 = vmatpush.msra.mxu0 %v153
    %919 = vmatpush.msra.mxu0 %v151
    %920 = vmatpush.msra.mxu0 %v149
    %921 = vmatmul.f32.gmra.mxu0 %v189
    %v922 = vpop.f32.mrf.mxu0
    %v923 = vadd.f32 %v798, %v922
    %924 = vmatmul.f32.gmra.mxu0 %v192
    %v925 = vpop.f32.mrf.mxu0
    %v926 = vadd.f32 %v801, %v925
    %927 = vmatmul.f32.gmra.mxu0 %v195
    %v928 = vpop.f32.mrf.mxu0
    %v929 = vadd.f32 %v804, %v928
    %930 = vmatmul.f32.gmra.mxu0 %v198
    %v931 = vpop.f32.mrf.mxu0
    %v932 = vadd.f32 %v807, %v931
    %933 = vmatmul.f32.gmra.mxu0 %v201
    %v934 = vpop.f32.mrf.mxu0
    %v935 = vadd.f32 %v810, %v934
    %936 = vmatmul.f32.gmra.mxu0 %v204
    %v937 = vpop.f32.mrf.mxu0
    %v938 = vadd.f32 %v813, %v937
    %939 = vmatmul.f32.gmra.mxu0 %v207
    %v940 = vpop.f32.mrf.mxu0
    %v941 = vadd.f32 %v816, %v940
    %942 = vmatmul.f32.gmra.mxu0 %v210
    %v943 = vpop.f32.mrf.mxu0
    %v944 = vadd.f32 %v819, %v943
    %945 = vmatmul.f32.gmra.mxu0 %v213
    %v946 = vpop.f32.mrf.mxu0
    %v947 = vadd.f32 %v822, %v946
    %948 = vmatmul.f32.gmra.mxu0 %v216
    %v949 = vpop.f32.mrf.mxu0
    %v950 = vadd.f32 %v825, %v949
    %951 = vmatmul.f32.gmra.mxu0 %v219
    %v952 = vpop.f32.mrf.mxu0
    %v953 = vadd.f32 %v828, %v952
    %954 = vmatmul.f32.gmra.mxu0 %v222
    %v955 = vpop.f32.mrf.mxu0
    %v956 = vadd.f32 %v831, %v955
    %957 = vmatmul.f32.gmra.mxu0 %v225
    %v958 = vpop.f32.mrf.mxu0
    %v959 = vadd.f32 %v834, %v958
    %960 = vmatmul.f32.gmra.mxu0 %v228
    %v961 = vpop.f32.mrf.mxu0
    %v962 = vadd.f32 %v837, %v961
    %963 = vmatmul.f32.gmra.mxu0 %v231
    %v964 = vpop.f32.mrf.mxu0
    %v965 = vadd.f32 %v840, %v964
    %966 = vmatmul.f32.gmra.mxu0 %v234
    %v967 = vpop.f32.mrf.mxu0
    %v968 = vadd.f32 %v843, %v967
    %969 = vmatmul.f32.gmra.mxu0 %v237
    %v970 = vpop.f32.mrf.mxu0
    %v971 = vadd.f32 %v846, %v970
    %972 = vmatmul.f32.gmra.mxu0 %v240
    %v973 = vpop.f32.mrf.mxu0
    %v974 = vadd.f32 %v849, %v973
    %975 = vmatmul.f32.gmra.mxu0 %v243
    %v976 = vpop.f32.mrf.mxu0
    %v977 = vadd.f32 %v852, %v976
    %978 = vmatmul.f32.gmra.mxu0 %v246
    %v979 = vpop.f32.mrf.mxu0
    %v980 = vadd.f32 %v855, %v979
    %981 = vmatmul.f32.gmra.mxu0 %v249
    %v982 = vpop.f32.mrf.mxu0
    %v983 = vadd.f32 %v858, %v982
    %984 = vmatmul.f32.gmra.mxu0 %v252
    %v985 = vpop.f32.mrf.mxu0
    %v986 = vadd.f32 %v861, %v985
    %987 = vmatmul.f32.gmra.mxu0 %v255
    %v988 = vpop.f32.mrf.mxu0
    %v989 = vadd.f32 %v864, %v988
    %990 = vmatmul.f32.gmra.mxu0 %v258
    %v991 = vpop.f32.mrf.mxu0
    %v992 = vadd.f32 %v867, %v991
    %993 = vmatmul.f32.gmra.mxu0 %v261
    %v994 = vpop.f32.mrf.mxu0
    %v995 = vadd.f32 %v870, %v994
    %996 = vmatmul.f32.gmra.mxu0 %v264
    %v997 = vpop.f32.mrf.mxu0
    %v998 = vadd.f32 %v873, %v997
    %999 = vmatmul.f32.gmra.mxu0 %v267
    %v1000 = vpop.f32.mrf.mxu0
    %v1001 = vadd.f32 %v876, %v1000
    %1002 = vmatmul.f32.gmra.mxu0 %v270
    %v1003 = vpop.f32.mrf.mxu0
    %v1004 = vadd.f32 %v879, %v1003
    %1005 = vmatmul.f32.gmra.mxu0 %v273
    %v1006 = vpop.f32.mrf.mxu0
    %v1007 = vadd.f32 %v882, %v1006
    %1008 = vmatmul.f32.gmra.mxu0 %v276
    %v1009 = vpop.f32.mrf.mxu0
    %v1010 = vadd.f32 %v885, %v1009
    %1011 = vmatmul.f32.gmra.mxu0 %v279
    %v1012 = vpop.f32.mrf.mxu0
    %v1013 = vadd.f32 %v888, %v1012
    %1014 = vmatmul.f32.gmra.mxu0 %v282
    %v1015 = vpop.f32.mrf.mxu0
    %v1016 = vadd.f32 %v891, %v1015
    %1017 = vmatmul.f32.gmra.mxu0 %v285
    %v1018 = vpop.f32.mrf.mxu0
    %v1019 = vadd.f32 %v894, %v1018
    %1020 = vmatmul.f32.gmra.mxu0 %v288
    %v1021 = vpop.f32.mrf.mxu0
    %v1022 = vadd.f32 %v897, %v1021
    %1023 = vmatmul.f32.gmra.mxu0 %v291
    %v1024 = vpop.f32.mrf.mxu0
    %v1025 = vadd.f32 %v900, %v1024
    %1026 = vmatmul.f32.gmra.mxu0 %v294
    %v1027 = vpop.f32.mrf.mxu0
    %v1028 = vadd.f32 %v903, %v1027
    %1029 = vdwg.mxu0
    %1030 = vmatpush.msra.mxu0 0.0
    %1031 = vmatpush.msra.mxu0 0.0
    %1032 = vmatpush.msra.mxu0 0.0
    %1033 = vmatpush.msra.mxu0 0.0
    %1034 = vmatpush.msra.mxu0 0.0
    %1035 = vmatpush.msra.mxu0 0.0
    %1036 = vmatpush.msra.mxu0 0.0
    %1037 = vmatpush.msra.mxu0 0.0
    %1038 = vmatpush.msra.mxu0 0.0
    %1039 = vmatpush.msra.mxu0 0.0
    %1040 = vmatpush.msra.mxu0 0.0
    %1041 = vmatpush.msra.mxu0 0.0
    %1042 = vmatpush.msra.mxu0 %v187
    %1043 = vmatpush.msra.mxu0 %v185
    %1044 = vmatpush.msra.mxu0 %v183
    %1045 = vmatpush.msra.mxu0 %v181
    %1046 = vmatmul.f32.gmra.mxu0 %v298
    %v1047 = vpop.f32.mrf.mxu0
    %v1048 = vadd.f32 %v923, %v1047
    %1049 = vmatmul.f32.gmra.mxu0 %v301
    %v1050 = vpop.f32.mrf.mxu0
    %v1051 = vadd.f32 %v926, %v1050
    %1052 = vmatmul.f32.gmra.mxu0 %v304
    %v1053 = vpop.f32.mrf.mxu0
    %v1054 = vadd.f32 %v929, %v1053
    %1055 = vmatmul.f32.gmra.mxu0 %v307
    %v1056 = vpop.f32.mrf.mxu0
    %v1057 = vadd.f32 %v932, %v1056
    %1058 = vmatmul.f32.gmra.mxu0 %v310
    %v1059 = vpop.f32.mrf.mxu0
    %v1060 = vadd.f32 %v935, %v1059
    %1061 = vmatmul.f32.gmra.mxu0 %v313
    %v1062 = vpop.f32.mrf.mxu0
    %v1063 = vadd.f32 %v938, %v1062
    %1064 = vmatmul.f32.gmra.mxu0 %v316
    %v1065 = vpop.f32.mrf.mxu0
    %v1066 = vadd.f32 %v941, %v1065
    %1067 = vmatmul.f32.gmra.mxu0 %v319
    %v1068 = vpop.f32.mrf.mxu0
    %v1069 = vadd.f32 %v944, %v1068
    %1070 = vmatmul.f32.gmra.mxu0 %v322
    %v1071 = vpop.f32.mrf.mxu0
    %v1072 = vadd.f32 %v947, %v1071
    %1073 = vmatmul.f32.gmra.mxu0 %v325
    %v1074 = vpop.f32.mrf.mxu0
    %v1075 = vadd.f32 %v950, %v1074
    %1076 = vmatmul.f32.gmra.mxu0 %v328
    %v1077 = vpop.f32.mrf.mxu0
    %v1078 = vadd.f32 %v953, %v1077
    %1079 = vmatmul.f32.gmra.mxu0 %v331
    %v1080 = vpop.f32.mrf.mxu0
    %v1081 = vadd.f32 %v956, %v1080
    %1082 = vmatmul.f32.gmra.mxu0 %v334
    %v1083 = vpop.f32.mrf.mxu0
    %v1084 = vadd.f32 %v959, %v1083
    %1085 = vmatmul.f32.gmra.mxu0 %v337
    %v1086 = vpop.f32.mrf.mxu0
    %v1087 = vadd.f32 %v962, %v1086
    %1088 = vmatmul.f32.gmra.mxu0 %v340
    %v1089 = vpop.f32.mrf.mxu0
    %v1090 = vadd.f32 %v965, %v1089
    %1091 = vmatmul.f32.gmra.mxu0 %v343
    %v1092 = vpop.f32.mrf.mxu0
    %v1093 = vadd.f32 %v968, %v1092
    %1094 = vmatmul.f32.gmra.mxu0 %v346
    %v1095 = vpop.f32.mrf.mxu0
    %v1096 = vadd.f32 %v971, %v1095
    %1097 = vmatmul.f32.gmra.mxu0 %v349
    %v1098 = vpop.f32.mrf.mxu0
    %v1099 = vadd.f32 %v974, %v1098
    %1100 = vmatmul.f32.gmra.mxu0 %v352
    %v1101 = vpop.f32.mrf.mxu0
    %v1102 = vadd.f32 %v977, %v1101
    %1103 = vmatmul.f32.gmra.mxu0 %v355
    %v1104 = vpop.f32.mrf.mxu0
    %v1105 = vadd.f32 %v980, %v1104
    %1106 = vmatmul.f32.gmra.mxu0 %v358
    %v1107 = vpop.f32.mrf.mxu0
    %v1108 = vadd.f32 %v983, %v1107
    %1109 = vmatmul.f32.gmra.mxu0 %v361
    %v1110 = vpop.f32.mrf.mxu0
    %v1111 = vadd.f32 %v986, %v1110
    %1112 = vmatmul.f32.gmra.mxu0 %v364
    %v1113 = vpop.f32.mrf.mxu0
    %v1114 = vadd.f32 %v989, %v1113
    %1115 = vmatmul.f32.gmra.mxu0 %v367
    %v1116 = vpop.f32.mrf.mxu0
    %v1117 = vadd.f32 %v992, %v1116
    %1118 = vmatmul.f32.gmra.mxu0 %v370
    %v1119 = vpop.f32.mrf.mxu0
    %v1120 = vadd.f32 %v995, %v1119
    %1121 = vmatmul.f32.gmra.mxu0 %v373
    %v1122 = vpop.f32.mrf.mxu0
    %v1123 = vadd.f32 %v998, %v1122
    %1124 = vmatmul.f32.gmra.mxu0 %v376
    %v1125 = vpop.f32.mrf.mxu0
    %v1126 = vadd.f32 %v1001, %v1125
    %1127 = vmatmul.f32.gmra.mxu0 %v379
    %v1128 = vpop.f32.mrf.mxu0
    %v1129 = vadd.f32 %v1004, %v1128
    %1130 = vmatmul.f32.gmra.mxu0 %v382
    %v1131 = vpop.f32.mrf.mxu0
    %v1132 = vadd.f32 %v1007, %v1131
    %1133 = vmatmul.f32.gmra.mxu0 %v385
    %v1134 = vpop.f32.mrf.mxu0
    %v1135 = vadd.f32 %v1010, %v1134
    %1136 = vmatmul.f32.gmra.mxu0 %v388
    %v1137 = vpop.f32.mrf.mxu0
    %v1138 = vadd.f32 %v1013, %v1137
    %1139 = vmatmul.f32.gmra.mxu0 %v391
    %v1140 = vpop.f32.mrf.mxu0
    %v1141 = vadd.f32 %v1016, %v1140
    %1142 = vmatmul.f32.gmra.mxu0 %v394
    %v1143 = vpop.f32.mrf.mxu0
    %v1144 = vadd.f32 %v1019, %v1143
    %1145 = vmatmul.f32.gmra.mxu0 %v397
    %v1146 = vpop.f32.mrf.mxu0
    %v1147 = vadd.f32 %v1022, %v1146
    %1148 = vmatmul.f32.gmra.mxu0 %v400
    %v1149 = vpop.f32.mrf.mxu0
    %v1150 = vadd.f32 %v1025, %v1149
    %1151 = vmatmul.f32.gmra.mxu0 %v403
    %v1152 = vpop.f32.mrf.mxu0
    %v1153 = vadd.f32 %v1028, %v1152
    %1154 = vdwg.mxu0
    %1155 = vst [vmem:[#allocation7] sm:$0xff] %v673
    %vm1156 = vcmask 556032
    %1157 = vst.msk [vmem:[#allocation7 + $0x8] sm:$0xff] %vm1156, %v1048
    %1158 = vst [vmem:[#allocation7 + $0x10] sm:$0xff] %v676
    %1159 = vst.msk [vmem:[#allocation7 + $0x18] sm:$0xff] %vm1156, %v1051
    %1160 = vst [vmem:[#allocation7 + $0x20] sm:$0xff] %v679
    %1161 = vst.msk [vmem:[#allocation7 + $0x28] sm:$0xff] %vm1156, %v1054
    %1162 = vst [vmem:[#allocation7 + $0x30] sm:$0xff] %v682
    %1163 = vst.msk [vmem:[#allocation7 + $0x38] sm:$0xff] %vm1156, %v1057
    %1164 = vst [vmem:[#allocation7 + $0x40] sm:$0xff] %v685
    %1165 = vst.msk [vmem:[#allocation7 + $0x48] sm:$0xff] %vm1156, %v1060
    %1166 = vst [vmem:[#allocation7 + $0x50] sm:$0xff] %v688
    %1167 = vst.msk [vmem:[#allocation7 + $0x58] sm:$0xff] %vm1156, %v1063
    %1168 = vst [vmem:[#allocation7 + $0x60] sm:$0xff] %v691
    %1169 = vst.msk [vmem:[#allocation7 + $0x68] sm:$0xff] %vm1156, %v1066
    %1170 = vst [vmem:[#allocation7 + $0x70] sm:$0xff] %v694
    %1171 = vst.msk [vmem:[#allocation7 + $0x78] sm:$0xff] %vm1156, %v1069
    %1172 = vst [vmem:[#allocation7 + $0x80] sm:$0xff] %v697
    %1173 = vst.msk [vmem:[#allocation7 + $0x88] sm:$0xff] %vm1156, %v1072
    %1174 = vst [vmem:[#allocation7 + $0x90] sm:$0xff] %v700
    %1175 = vst.msk [vmem:[#allocation7 + $0x98] sm:$0xff] %vm1156, %v1075
    %1176 = vst [vmem:[#allocation7 + $0xa0] sm:$0xff] %v703
    %1177 = vst.msk [vmem:[#allocation7 + $0xa8] sm:$0xff] %vm1156, %v1078
    %1178 = vst [vmem:[#allocation7 + $0xb0] sm:$0xff] %v706
    %1179 = vst.msk [vmem:[#allocation7 + $0xb8] sm:$0xff] %vm1156, %v1081
    %1180 = vst [vmem:[#allocation7 + $0xc0] sm:$0xff] %v709
    %1181 = vst.msk [vmem:[#allocation7 + $0xc8] sm:$0xff] %vm1156, %v1084
    %1182 = vst [vmem:[#allocation7 + $0xd0] sm:$0xff] %v712
    %1183 = vst.msk [vmem:[#allocation7 + $0xd8] sm:$0xff] %vm1156, %v1087
    %1184 = vst [vmem:[#allocation7 + $0xe0] sm:$0xff] %v715
    %1185 = vst.msk [vmem:[#allocation7 + $0xe8] sm:$0xff] %vm1156, %v1090
    %1186 = vst [vmem:[#allocation7 + $0xf0] sm:$0xff] %v718
    %1187 = vst.msk [vmem:[#allocation7 + $0xf8] sm:$0xff] %vm1156, %v1093
    %1188 = vst [vmem:[#allocation7 + $0x100] sm:$0xff] %v721
    %1189 = vst.msk [vmem:[#allocation7 + $0x108] sm:$0xff] %vm1156, %v1096
    %1190 = vst [vmem:[#allocation7 + $0x110] sm:$0xff] %v724
    %1191 = vst.msk [vmem:[#allocation7 + $0x118] sm:$0xff] %vm1156, %v1099
    %1192 = vst [vmem:[#allocation7 + $0x120] sm:$0xff] %v727
    %1193 = vst.msk [vmem:[#allocation7 + $0x128] sm:$0xff] %vm1156, %v1102
    %1194 = vst [vmem:[#allocation7 + $0x130] sm:$0xff] %v730
    %1195 = vst.msk [vmem:[#allocation7 + $0x138] sm:$0xff] %vm1156, %v1105
    %1196 = vst [vmem:[#allocation7 + $0x140] sm:$0xff] %v733
    %1197 = vst.msk [vmem:[#allocation7 + $0x148] sm:$0xff] %vm1156, %v1108
    %1198 = vst [vmem:[#allocation7 + $0x150] sm:$0xff] %v736
    %1199 = vst.msk [vmem:[#allocation7 + $0x158] sm:$0xff] %vm1156, %v1111
    %1200 = vst [vmem:[#allocation7 + $0x160] sm:$0xff] %v739
    %1201 = vst.msk [vmem:[#allocation7 + $0x168] sm:$0xff] %vm1156, %v1114
    %1202 = vst [vmem:[#allocation7 + $0x170] sm:$0xff] %v742
    %1203 = vst.msk [vmem:[#allocation7 + $0x178] sm:$0xff] %vm1156, %v1117
    %1204 = vst [vmem:[#allocation7 + $0x180] sm:$0xff] %v745
    %1205 = vst.msk [vmem:[#allocation7 + $0x188] sm:$0xff] %vm1156, %v1120
    %1206 = vst [vmem:[#allocation7 + $0x190] sm:$0xff] %v748
    %1207 = vst.msk [vmem:[#allocation7 + $0x198] sm:$0xff] %vm1156, %v1123
    %1208 = vst [vmem:[#allocation7 + $0x1a0] sm:$0xff] %v751
    %1209 = vst.msk [vmem:[#allocation7 + $0x1a8] sm:$0xff] %vm1156, %v1126
    %1210 = vst [vmem:[#allocation7 + $0x1b0] sm:$0xff] %v754
    %1211 = vst.msk [vmem:[#allocation7 + $0x1b8] sm:$0xff] %vm1156, %v1129
    %1212 = vst [vmem:[#allocation7 + $0x1c0] sm:$0xff] %v757
    %1213 = vst.msk [vmem:[#allocation7 + $0x1c8] sm:$0xff] %vm1156, %v1132
    %1214 = vst [vmem:[#allocation7 + $0x1d0] sm:$0xff] %v760
    %1215 = vst.msk [vmem:[#allocation7 + $0x1d8] sm:$0xff] %vm1156, %v1135
    %1216 = vst [vmem:[#allocation7 + $0x1e0] sm:$0xff] %v763
    %1217 = vst.msk [vmem:[#allocation7 + $0x1e8] sm:$0xff] %vm1156, %v1138
    %1218 = vst [vmem:[#allocation7 + $0x1f0] sm:$0xff] %v766
    %1219 = vst.msk [vmem:[#allocation7 + $0x1f8] sm:$0xff] %vm1156, %v1141
    %1220 = vst [vmem:[#allocation7 + $0x200] sm:$0xff] %v769
    %1221 = vst.msk [vmem:[#allocation7 + $0x208] sm:$0xff] %vm1156, %v1144
    %1222 = vst [vmem:[#allocation7 + $0x210] sm:$0xff] %v772
    %1223 = vst.msk [vmem:[#allocation7 + $0x218] sm:$0xff] %vm1156, %v1147
    %1224 = vst [vmem:[#allocation7 + $0x220] sm:$0xff] %v775
    %1225 = vst.msk [vmem:[#allocation7 + $0x228] sm:$0xff] %vm1156, %v1150
    %1226 = vst [vmem:[#allocation7 + $0x230] sm:$0xff] %v778
    %1227 = vst.msk [vmem:[#allocation7 + $0x238] sm:$0xff] %vm1156, %v1153
    // Predicated region
    $region18: #{tpu_custom_call.1} parent=1 // pred_check
      _
    $region19: #{tpu_custom_call.1} parent=1 // pred_check_branch
      %1229 = sbr.rel (0) target = $region21
    $region20: #{tpu_custom_call.1} parent=1 // pred_region
      %1231 = vsyncadd [#allocation4], 0
      %s1232 = sshll.u32 [#allocation7], 4
      %s1233 = int_to_ptr.vmem [resolvable:$true] %s1232
      %s1234 = sshll.u32 %s2, 4
      %s1235 = int_to_ptr.hbm [resolvable:$true] %s1234
      %1240 = dma.vmem_to_hbm [thread:$0]  %s1233, 9216, %s1235, [#allocation4], 256, 256, 16
    $region21: #{tpu_custom_call.1} parent=1 // pred_fallthru
      _
    // Predicated region
    $region22: #{tpu_custom_call.1} parent=1 // pred_check
      _
    $region23: #{tpu_custom_call.1} parent=1 // pred_check_branch
      %1242 = sbr.rel (0) target = $region25
    $region24: #{tpu_custom_call.1} parent=1 // pred_region
      %1244 = dma.done [#allocation4], 9216
    $region25: #{tpu_custom_call.1} parent=1 // pred_fallthru
      _
    %1245 = vsyncpa [#allocation3], 1
    %1246 = vsyncpa [#allocation6], 1
    %1247 = vsyncpa [#allocation4], 1

</llo_original>
